<compile_context>
chip_gen: v6e
topology: v6e:2x2x1
jax: 0.10.0
libtpu: 0.0.40
codegen_flags: <defaults>
</compile_context>

<pallas_src>
import jax
import jax.numpy as jnp
from jax.experimental import pallas as pl
from jax.experimental.pallas import tpu as pltpu

N_OBS = 10
N_ACT = 4
HIDDEN = 128


def _round_up(x, m):
    return ((x + m - 1) // m) * m


def qnet_kernel(s_ref, a_ref, w1s_ref, w1a_ref, b1_ref, w2_ref, b2_ref,
                w3_ref, b3_ref, o_ref):
    # Layer 1: the dim-1 concat is realized as two small-K bf16 MXU matmuls
    # (K=10 and K=4) accumulated in f32; bias + ReLU on the VPU in f32.
    h1 = jnp.dot(s_ref[...].astype(jnp.bfloat16), w1s_ref[...],
                 preferred_element_type=jnp.float32)
    h1 = h1 + jnp.dot(a_ref[...].astype(jnp.bfloat16), w1a_ref[...],
                      preferred_element_type=jnp.float32)
    h1 = jnp.maximum(h1 + b1_ref[...], 0.0)

    # Layer 2: bf16 MXU matmul, f32 accumulate, bias + ReLU in f32.
    h2 = jnp.dot(h1.astype(jnp.bfloat16), w2_ref[...],
                 preferred_element_type=jnp.float32) + b2_ref[...]
    h2 = jnp.maximum(h2, 0.0)

    # Layer 3: (tb,128) @ (128,1) on the MXU (dedicated slot with headroom)
    # instead of a cross-lane XLU reduce chain; bias add in f32 on the VPU.
    q = jnp.dot(h2.astype(jnp.bfloat16), w3_ref[...],
                preferred_element_type=jnp.float32)
    o_ref[...] = q + b3_ref[...]


def qnet_forward(state, act, params, *, block_rows=4096):
    """state: (B, N_OBS) f32, act: (B, N_ACT) f32 -> (B, 1) f32."""
    w1, b1, w2, b2, w3, b3 = params
    B = state.shape[0]

    # Tiny weight-side preprocessing (a few KiB — negligible, batch-independent):
    # split w1 by input source and cast MXU operands to bf16.
    w1s = w1[:N_OBS].astype(jnp.bfloat16)            # (10, 128)
    w1a = w1[N_OBS:].astype(jnp.bfloat16)            # (4, 128)
    w2b = w2.astype(jnp.bfloat16)                    # (128, 128)
    w3c = w3.reshape(HIDDEN, 1).astype(jnp.bfloat16) # (128, 1)
    b1r = b1.reshape(1, HIDDEN).astype(jnp.float32)
    b2r = b2.reshape(1, HIDDEN).astype(jnp.float32)
    b3r = b3.reshape(1, 1).astype(jnp.float32)

    # Batch tile: cap at block_rows, but never collapse the grid below 2 steps
    # when the batch allows it (keeps both v7x TensorCores busy under
    # dimension_semantics=("parallel",)); 8-row aligned for the (8,128) rule.
    tb = min(block_rows, max(8, _round_up(pl.cdiv(B, 2), 8)))
    if tb >= B:
        tb = B  # single tile (small batches)
    grid = (pl.cdiv(B, tb),)

    const = lambda i: (0, 0)   # weights/biases: same block every step (resident)
    batch = lambda i: (i, 0)   # activations/output: stream over the batch

    return pl.pallas_call(
        qnet_kernel,
        out_shape=jax.ShapeDtypeStruct((B, 1), jnp.float32),
        grid=grid,
        in_specs=[
            pl.BlockSpec((tb, N_OBS), batch),        # state (f32)
            pl.BlockSpec((tb, N_ACT), batch),        # act   (f32)
            pl.BlockSpec((N_OBS, HIDDEN), const),    # w1_state (bf16)
            pl.BlockSpec((N_ACT, HIDDEN), const),    # w1_act   (bf16)
            pl.BlockSpec((1, HIDDEN), const),        # b1 (f32)
            pl.BlockSpec((HIDDEN, HIDDEN), const),   # w2 (bf16)
            pl.BlockSpec((1, HIDDEN), const),        # b2 (f32)
            pl.BlockSpec((HIDDEN, 1), const),        # w3 column (bf16)
            pl.BlockSpec((1, 1), const),             # b3 (f32)
        ],
        out_specs=pl.BlockSpec((tb, 1), batch),
        compiler_params=pltpu.CompilerParams(
            dimension_semantics=("parallel",),       # megacore shard on v7x
            vmem_limit_bytes=32 * 1024 * 1024,       # safe headroom on v5e's 16 MiB default
        ),
    )(state, act, w1s, w1a, b1r, w2b, b2r, w3c, b3r)


def init_params(key):
    """Deterministic PyTorch-style init: U(-1/sqrt(fan_in), 1/sqrt(fan_in))."""
    def linear(key, fan_in, fan_out):
        kw, kb = jax.random.split(key)
        bound = 1.0 / jnp.sqrt(fan_in)
        w = jax.random.uniform(kw, (fan_in, fan_out), jnp.float32, -bound, bound)
        b = jax.random.uniform(kb, (fan_out,), jnp.float32, -bound, bound)
        return w, b

    k1, k2, k3 = jax.random.split(key, 3)
    w1, b1 = linear(k1, N_OBS + N_ACT, HIDDEN)
    w2, b2 = linear(k2, HIDDEN, HIDDEN)
    w3, b3 = linear(k3, HIDDEN, 1)
    return (w1, b1, w2, b2, w3, b3)


def qnet_reference(state, act, params):
    w1, b1, w2, b2, w3, b3 = params
    x = jnp.concatenate([state, act], axis=1)
    x = jnp.maximum(x @ w1 + b1, 0.0)
    x = jnp.maximum(x @ w2 + b2, 0.0)
    return x @ w3 + b3


if __name__ == "__main__":
    key = jax.random.PRNGKey(0)
    kp, ks, ka = jax.random.split(key, 3)
    params = init_params(kp)

    # Small-batch check (single grid step, tb == B).
    B = 4
    state = jax.random.normal(ks, (B, N_OBS), jnp.float32)
    act = jax.random.normal(ka, (B, N_ACT), jnp.float32)
    out = jax.block_until_ready(qnet_forward(state, act, params))
    ref = qnet_reference(state, act, params)
    assert out.shape == (B, 1)
    # bf16 MXU operands with f32 accumulation -> ~1e-3-level deviation from f32 ref.
    assert jnp.allclose(out, ref, atol=5e-2, rtol=5e-2), (out, ref)

    # Tiled check: grid of 2 full tiles (one per v7x TensorCore), exercises the
    # pipelined batch grid at the raised tile size.
    B2 = 8192
    ks2, ka2 = jax.random.split(jax.random.PRNGKey(1))
    state2 = jax.random.normal(ks2, (B2, N_OBS), jnp.float32)
    act2 = jax.random.normal(ka2, (B2, N_ACT), jnp.float32)
    out2 = jax.block_until_ready(qnet_forward(state2, act2, params))
    ref2 = qnet_reference(state2, act2, params)
    assert out2.shape == (B2, 1)
    assert jnp.allclose(out2, ref2, atol=5e-2, rtol=5e-2)

    # Ragged check: B not a multiple of the tile -> partial last tile (OOB rows
    # padded by Pallas, clipped on writeback).
    B3 = 1000
    ks3, ka3 = jax.random.split(jax.random.PRNGKey(2))
    state3 = jax.random.normal(ks3, (B3, N_OBS), jnp.float32)
    act3 = jax.random.normal(ka3, (B3, N_ACT), jnp.float32)
    out3 = jax.block_until_ready(qnet_forward(state3, act3, params))
    ref3 = qnet_reference(state3, act3, params)
    assert out3.shape == (B3, 1)
    assert jnp.allclose(out3, ref3, atol=5e-2, rtol=5e-2)

    print("KERNEL_OK")
</pallas_src>

<mosaic_0001>
module attributes {stable_mosaic.version = 11 : i64} {
  func.func @qnet_kernel(%arg0: i32, %arg1: memref<4x10xf32, #tpu.memory_space<vmem>>, %arg2: memref<4x4xf32, #tpu.memory_space<vmem>>, %arg3: memref<10x128xbf16, #tpu.memory_space<vmem>>, %arg4: memref<4x128xbf16, #tpu.memory_space<vmem>>, %arg5: memref<1x128xf32, #tpu.memory_space<vmem>>, %arg6: memref<128x128xbf16, #tpu.memory_space<vmem>>, %arg7: memref<1x128xf32, #tpu.memory_space<vmem>>, %arg8: memref<128x1xbf16, #tpu.memory_space<vmem>>, %arg9: memref<1x1xf32, #tpu.memory_space<vmem>>, %arg10: memref<4x1xf32, #tpu.memory_space<vmem>>) attributes {dimension_semantics = [#tpu.dimension_semantics<parallel>], iteration_bounds = array<i64: 1>, scalar_prefetch = 0 : i64, scratch_operands = 0 : i64, tpu.core_type = #tpu.core_type<tc>, window_params = [{transform_indices = @transform_0, window_bounds = array<i64: 4, 10>}, {transform_indices = @transform_1, window_bounds = array<i64: 4, 4>}, {pipeline_mode = #tpu.pipeline_mode<synchronous>, transform_indices = @transform_2, window_bounds = array<i64: 10, 128>}, {pipeline_mode = #tpu.pipeline_mode<synchronous>, transform_indices = @transform_3, window_bounds = array<i64: 4, 128>}, {pipeline_mode = #tpu.pipeline_mode<synchronous>, transform_indices = @transform_4, window_bounds = array<i64: 1, 128>}, {pipeline_mode = #tpu.pipeline_mode<synchronous>, transform_indices = @transform_5, window_bounds = array<i64: 128, 128>}, {pipeline_mode = #tpu.pipeline_mode<synchronous>, transform_indices = @transform_6, window_bounds = array<i64: 1, 128>}, {pipeline_mode = #tpu.pipeline_mode<synchronous>, transform_indices = @transform_7, window_bounds = array<i64: 128, 1>}, {pipeline_mode = #tpu.pipeline_mode<synchronous>, transform_indices = @transform_8, window_bounds = array<i64: 1, 1>}, {transform_indices = @transform_9, window_bounds = array<i64: 4, 1>}]} {
    %c0 = arith.constant 0 : index
    %c0_0 = arith.constant 0 : index
    %0 = vector.load %arg1[%c0, %c0_0] : memref<4x10xf32, #tpu.memory_space<vmem>>, vector<4x10xf32>
    %1 = arith.truncf %0 : vector<4x10xf32> to vector<4x10xbf16>
    %c0_1 = arith.constant 0 : index
    %c0_2 = arith.constant 0 : index
    %2 = vector.load %arg3[%c0_1, %c0_2] : memref<10x128xbf16, #tpu.memory_space<vmem>>, vector<10x128xbf16>
    %cst = arith.constant dense<0.000000e+00> : vector<4x128xf32>
    %3 = tpu.matmul %1, %2, %cst {dimension_numbers = #tpu.dot_dimension_numbers<[1], [0], [0], [1], [0, 0, 1, 1], [], []>} : vector<4x10xbf16>, vector<10x128xbf16>, vector<4x128xf32> -> vector<4x128xf32>
    %c0_3 = arith.constant 0 : index
    %c0_4 = arith.constant 0 : index
    %4 = vector.load %arg2[%c0_3, %c0_4] : memref<4x4xf32, #tpu.memory_space<vmem>>, vector<4x4xf32>
    %5 = arith.truncf %4 : vector<4x4xf32> to vector<4x4xbf16>
    %c0_5 = arith.constant 0 : index
    %c0_6 = arith.constant 0 : index
    %6 = vector.load %arg4[%c0_5, %c0_6] : memref<4x128xbf16, #tpu.memory_space<vmem>>, vector<4x128xbf16>
    %cst_7 = arith.constant dense<0.000000e+00> : vector<4x128xf32>
    %7 = tpu.matmul %5, %6, %cst_7 {dimension_numbers = #tpu.dot_dimension_numbers<[1], [0], [0], [1], [0, 0, 1, 1], [], []>} : vector<4x4xbf16>, vector<4x128xbf16>, vector<4x128xf32> -> vector<4x128xf32>
    %8 = arith.addf %3, %7 : vector<4x128xf32>
    %c0_8 = arith.constant 0 : index
    %c0_9 = arith.constant 0 : index
    %9 = vector.load %arg5[%c0_8, %c0_9] : memref<1x128xf32, #tpu.memory_space<vmem>>, vector<1x128xf32>
    %10 = vector.broadcast %9 : vector<1x128xf32> to vector<4x128xf32>
    %11 = arith.addf %8, %10 : vector<4x128xf32>
    %cst_10 = arith.constant 0.000000e+00 : f32
    %12 = vector.broadcast %cst_10 : f32 to vector<4x128xf32>
    %13 = arith.maximumf %11, %12 : vector<4x128xf32>
    %14 = arith.truncf %13 : vector<4x128xf32> to vector<4x128xbf16>
    %c0_11 = arith.constant 0 : index
    %c0_12 = arith.constant 0 : index
    %15 = vector.load %arg6[%c0_11, %c0_12] : memref<128x128xbf16, #tpu.memory_space<vmem>>, vector<128x128xbf16>
    %cst_13 = arith.constant dense<0.000000e+00> : vector<4x128xf32>
    %16 = tpu.matmul %14, %15, %cst_13 {dimension_numbers = #tpu.dot_dimension_numbers<[1], [0], [0], [1], [0, 0, 1, 1], [], []>} : vector<4x128xbf16>, vector<128x128xbf16>, vector<4x128xf32> -> vector<4x128xf32>
    %c0_14 = arith.constant 0 : index
    %c0_15 = arith.constant 0 : index
    %17 = vector.load %arg7[%c0_14, %c0_15] : memref<1x128xf32, #tpu.memory_space<vmem>>, vector<1x128xf32>
    %18 = vector.broadcast %17 : vector<1x128xf32> to vector<4x128xf32>
    %19 = arith.addf %16, %18 : vector<4x128xf32>
    %cst_16 = arith.constant 0.000000e+00 : f32
    %20 = vector.broadcast %cst_16 : f32 to vector<4x128xf32>
    %21 = arith.maximumf %19, %20 : vector<4x128xf32>
    %22 = arith.truncf %21 : vector<4x128xf32> to vector<4x128xbf16>
    %c0_17 = arith.constant 0 : index
    %c0_18 = arith.constant 0 : index
    %23 = vector.load %arg8[%c0_17, %c0_18] : memref<128x1xbf16, #tpu.memory_space<vmem>>, vector<128x1xbf16>
    %cst_19 = arith.constant dense<0.000000e+00> : vector<4x1xf32>
    %24 = tpu.matmul %22, %23, %cst_19 {dimension_numbers = #tpu.dot_dimension_numbers<[1], [0], [0], [1], [0, 0, 1, 1], [], []>} : vector<4x128xbf16>, vector<128x1xbf16>, vector<4x1xf32> -> vector<4x1xf32>
    %c0_20 = arith.constant 0 : index
    %c0_21 = arith.constant 0 : index
    %25 = vector.load %arg9[%c0_20, %c0_21] : memref<1x1xf32, #tpu.memory_space<vmem>>, vector<1x1xf32>
    %26 = vector.broadcast %25 : vector<1x1xf32> to vector<4x1xf32>
    %27 = arith.addf %24, %26 : vector<4x1xf32>
    %c0_22 = arith.constant 0 : index
    %c0_23 = arith.constant 0 : index
    %28 = vector.load %arg10[%c0_22, %c0_23] : memref<4x1xf32, #tpu.memory_space<vmem>>, vector<4x1xf32>
    tpu.vector_store %arg10[%c0_22, %c0_23], %27 {strides = array<i32>} : memref<4x1xf32, #tpu.memory_space<vmem>>, vector<4x1xf32>,
    return
  }
  func.func @transform_0(%arg0: i32) -> (i32, i32) {
    %c0_i32 = arith.constant 0 : i32
    %c0_i32_0 = arith.constant 0 : i32
    return %arg0, %c0_i32 : i32, i32
  }
  func.func @transform_1(%arg0: i32) -> (i32, i32) {
    %c0_i32 = arith.constant 0 : i32
    %c0_i32_0 = arith.constant 0 : i32
    return %arg0, %c0_i32 : i32, i32
  }
  func.func @transform_2(%arg0: i32) -> (i32, i32) {
    %c0_i32 = arith.constant 0 : i32
    %c0_i32_0 = arith.constant 0 : i32
    %c0_i32_1 = arith.constant 0 : i32
    return %c0_i32, %c0_i32_0 : i32, i32
  }
  func.func @transform_3(%arg0: i32) -> (i32, i32) {
    %c0_i32 = arith.constant 0 : i32
    %c0_i32_0 = arith.constant 0 : i32
    %c0_i32_1 = arith.constant 0 : i32
    return %c0_i32, %c0_i32_0 : i32, i32
  }
  func.func @transform_4(%arg0: i32) -> (i32, i32) {
    %c0_i32 = arith.constant 0 : i32
    %c0_i32_0 = arith.constant 0 : i32
    %c0_i32_1 = arith.constant 0 : i32
    return %c0_i32, %c0_i32_0 : i32, i32
  }
  func.func @transform_5(%arg0: i32) -> (i32, i32) {
    %c0_i32 = arith.constant 0 : i32
    %c0_i32_0 = arith.constant 0 : i32
    %c0_i32_1 = arith.constant 0 : i32
    return %c0_i32, %c0_i32_0 : i32, i32
  }
  func.func @transform_6(%arg0: i32) -> (i32, i32) {
    %c0_i32 = arith.constant 0 : i32
    %c0_i32_0 = arith.constant 0 : i32
    %c0_i32_1 = arith.constant 0 : i32
    return %c0_i32, %c0_i32_0 : i32, i32
  }
  func.func @transform_7(%arg0: i32) -> (i32, i32) {
    %c0_i32 = arith.constant 0 : i32
    %c0_i32_0 = arith.constant 0 : i32
    %c0_i32_1 = arith.constant 0 : i32
    return %c0_i32, %c0_i32_0 : i32, i32
  }
  func.func @transform_8(%arg0: i32) -> (i32, i32) {
    %c0_i32 = arith.constant 0 : i32
    %c0_i32_0 = arith.constant 0 : i32
    %c0_i32_1 = arith.constant 0 : i32
    return %c0_i32, %c0_i32_0 : i32, i32
  }
  func.func @transform_9(%arg0: i32) -> (i32, i32) {
    %c0_i32 = arith.constant 0 : i32
    %c0_i32_0 = arith.constant 0 : i32
    return %arg0, %c0_i32 : i32, i32
  }
}

</mosaic_0001>

<llo_original>
// kernel: tpu_custom_call.1
$region0: #{tpu_custom_call.1}
  #allocation0 [shape = 'u32[]', space=smem, size = 0x4, offset = 0x4, fixed_abs, tag = 'smem constant byte address 0x4 - core index']
  #allocation1 [shape = 'u32[144,128]{1,0:T(1,128)}', space=vmem, size = 0x12000, scoped, tag = 'internal scratch']
  #allocation2 [shape = 'f32[1,1]{1,0:T(1,128)S(1)}', space=vmem, size = 0x200, scoped, tag = 'scoped memory for tpu_custom_call.1']
  %s0 = inlined_call_operand.vmem [shape: f32[4,10], index: 0, kind: input, shape index: {}]
  %s1 = inlined_call_operand.hbm [shape: f32[4,4], index: 1, kind: input, shape index: {}]
  %s2 = inlined_call_operand.vmem [shape: bf16[10,128], index: 2, kind: input, shape index: {}]
  %s3 = inlined_call_operand.hbm [shape: bf16[4,128], index: 3, kind: input, shape index: {}]
  %s4 = inlined_call_operand.hbm [shape: f32[1,128], index: 4, kind: input, shape index: {}]
  %s5 = inlined_call_operand.vmem [shape: bf16[128,128], index: 5, kind: input, shape index: {}]
  %s6 = inlined_call_operand.vmem [shape: f32[1,128], index: 6, kind: input, shape index: {}]
  %s7 = inlined_call_operand.vmem [shape: bf16[128,1], index: 7, kind: input, shape index: {}]
  %s8 = inlined_call_operand.<no memory space> [shape: f32[1,1], index: 8, kind: input, shape index: {}]
  %s9 = inlined_call_operand.vmem [shape: f32[4,1], index: 9, kind: output, shape index: {}]
  %s10 = sld [smem:[#allocation0]]
  $region58: #{tpu_custom_call.1} parent=0
    _
  %s12 = ssub.s32 1, %s10
  %s13 = scalar_select 0, %s12, %s10
  %v14 = vstv %s8
  %15 = vst [vmem:[#allocation2] sm:$0x1] %v14
  $region1: #{tpu_custom_call.1} parent=0
    #allocation3 [shape = 'u8[2048]{0}', space=vmem, size = 0x800, scoped, tag = 'input window, operand 1, single buffered']
    #allocation4 [shape = 's32[1]{0}', space=sflag, size = 0x4, scoped, tag = 'scoped memory for tpu_custom_call.1']
    #allocation5 [shape = 'u8[1024]{0}', space=vmem, size = 0x400, scoped, tag = 'input window, operand 3, single buffered']
    #allocation6 [shape = 's32[1]{0}', space=sflag, size = 0x4, scoped, tag = 'scoped memory for tpu_custom_call.1']
    #allocation7 [shape = 'u8[512]{0}', space=vmem, size = 0x400, scoped, tag = 'input window, operand 4, single buffered']
    %16 = vsyncpa [#allocation4], 0
    %17 = vsyncpa [#allocation6], 0
    // Predicated region
    $region2: #{tpu_custom_call.1} parent=1 // pred_check
      _
    $region3: #{tpu_custom_call.1} parent=1 // pred_check_branch
      %19 = sbr.rel (0) target = $region5
    $region4: #{tpu_custom_call.1} parent=1 // pred_region
      _
    $region5: #{tpu_custom_call.1} parent=1 // pred_fallthru
      _
    // Predicated region
    $region6: #{tpu_custom_call.1} parent=1 // pred_check
      _
    $region7: #{tpu_custom_call.1} parent=1 // pred_check_branch
      %21 = sbr.rel (0) target = $region9
    $region8: #{tpu_custom_call.1} parent=1 // pred_region
      %s23 = ssub.s32 64, 64
      %24 = vsyncadd [#allocation4], %s23
      %s26 = sshll.u32 [#allocation3], 4
      %s27 = int_to_ptr.vmem [resolvable:$true] %s26
      %29 = dma.hbm_to_vmem [thread:$0]  %s1, 64, %s27, [#allocation4]
    $region9: #{tpu_custom_call.1} parent=1 // pred_fallthru
      _
    // Predicated region
    $region10: #{tpu_custom_call.1} parent=1 // pred_check
      _
    $region11: #{tpu_custom_call.1} parent=1 // pred_check_branch
      %31 = sbr.rel (0) target = $region13
    $region12: #{tpu_custom_call.1} parent=1 // pred_region
      _
    $region13: #{tpu_custom_call.1} parent=1 // pred_fallthru
      _
    // Predicated region
    $region14: #{tpu_custom_call.1} parent=1 // pred_check
      _
    $region15: #{tpu_custom_call.1} parent=1 // pred_check_branch
      %33 = sbr.rel (0) target = $region17
    $region16: #{tpu_custom_call.1} parent=1 // pred_region
      %s35 = ssub.s32 32, 32
      %36 = vsyncadd [#allocation6], %s35
      %s38 = sshll.u32 [#allocation5], 4
      %s39 = int_to_ptr.vmem [resolvable:$true] %s38
      %41 = dma.hbm_to_vmem [thread:$0]  %s3, 32, %s39, [#allocation6]
    $region17: #{tpu_custom_call.1} parent=1 // pred_fallthru
      _
    // Predicated region
    $region18: #{tpu_custom_call.1} parent=1 // pred_check
      _
    $region19: #{tpu_custom_call.1} parent=1 // pred_check_branch
      %43 = sbr.rel (0) target = $region21
    $region20: #{tpu_custom_call.1} parent=1 // pred_region
      %s45 = ssub.s32 16, 16
      %46 = vsyncadd [#allocation6], %s45
      %s48 = sshll.u32 [#allocation7], 4
      %s49 = int_to_ptr.vmem [resolvable:$true] %s48
      %51 = dma.hbm_to_vmem [thread:$0]  %s4, 16, %s49, [#allocation6]
    $region21: #{tpu_custom_call.1} parent=1 // pred_fallthru
      _
    // Predicated region
    $region22: #{tpu_custom_call.1} parent=1 // pred_check
      _
    $region23: #{tpu_custom_call.1} parent=1 // pred_check_branch
      %53 = sbr.rel (0) target = $region25
    $region24: #{tpu_custom_call.1} parent=1 // pred_region
      _
    $region25: #{tpu_custom_call.1} parent=1 // pred_fallthru
      _
    // Predicated region
    $region26: #{tpu_custom_call.1} parent=1 // pred_check
      _
    $region27: #{tpu_custom_call.1} parent=1 // pred_check_branch
      %55 = sbr.rel (0) target = $region29
    $region28: #{tpu_custom_call.1} parent=1 // pred_region
      _
    $region29: #{tpu_custom_call.1} parent=1 // pred_fallthru
      _
    // Predicated region
    $region30: #{tpu_custom_call.1} parent=1 // pred_check
      _
    $region31: #{tpu_custom_call.1} parent=1 // pred_check_branch
      %57 = sbr.rel (0) target = $region33
    $region32: #{tpu_custom_call.1} parent=1 // pred_region
      _
    $region33: #{tpu_custom_call.1} parent=1 // pred_fallthru
      _
    // Predicated region
    $region34: #{tpu_custom_call.1} parent=1 // pred_check
      _
    $region35: #{tpu_custom_call.1} parent=1 // pred_check_branch
      %59 = sbr.rel (0) target = $region37
    $region36: #{tpu_custom_call.1} parent=1 // pred_region
      _
    $region37: #{tpu_custom_call.1} parent=1 // pred_fallthru
      _
    // Predicated region
    $region38: #{tpu_custom_call.1} parent=1 // pred_check
      _
    $region39: #{tpu_custom_call.1} parent=1 // pred_check_branch
      %61 = sbr.rel (0) target = $region41
    $region40: #{tpu_custom_call.1} parent=1 // pred_region
      %62 = dma.done [#allocation4], 64
    $region41: #{tpu_custom_call.1} parent=1 // pred_fallthru
      _
    // Predicated region
    $region42: #{tpu_custom_call.1} parent=1 // pred_check
      _
    $region43: #{tpu_custom_call.1} parent=1 // pred_check_branch
      %64 = sbr.rel (0) target = $region45
    $region44: #{tpu_custom_call.1} parent=1 // pred_region
      %65 = dma.done [#allocation6], 32
    $region45: #{tpu_custom_call.1} parent=1 // pred_fallthru
      _
    // Predicated region
    $region46: #{tpu_custom_call.1} parent=1 // pred_check
      _
    $region47: #{tpu_custom_call.1} parent=1 // pred_check_branch
      %67 = sbr.rel (0) target = $region49
    $region48: #{tpu_custom_call.1} parent=1 // pred_region
      %68 = dma.done [#allocation6], 16
    $region49: #{tpu_custom_call.1} parent=1 // pred_fallthru
      _
    %v70 = vld [vmem:[%s0] sm:$0xf]
    %v71 = vpack.c.bf16 %v70, %v70
    %v72 = vld [vmem:[%s2] sm:$0xf]
    %v73 = vld [vmem:[%s2 + $0x4] sm:$0x1]
    %v74 = vld [vmem:[#allocation3] sm:$0xf]
    %v75 = vpack.c.bf16 %v74, %v74
    %v76 = vld [vmem:[#allocation5] sm:$0x3]
    %vm77 = vcmask 31744
    %v79 = vsel %vm77, %v75, 0
    %vm81 = vcmask 1041408
    %v83 = vsel %vm81, %v76, 0
    %85 = vmatprep.subr.bf16.mxu0 0
    %86 = vmatpush1.bf16.msra.mxu0 0
    %87 = vmatprep.subr.bf16.mxu0 0
    %88 = vmatpush1.bf16.msra.mxu0 0
    %89 = vmatprep.subr.bf16.mxu0 0
    %90 = vmatpush1.bf16.msra.mxu0 0
    %91 = vmatprep.subr.bf16.mxu0 0
    %92 = vmatpush1.bf16.msra.mxu0 0
    %93 = vmatprep.subr.bf16.mxu0 0
    %94 = vmatpush1.bf16.msra.mxu0 0
    %95 = vmatprep.subr.bf16.mxu0 0
    %96 = vmatpush1.bf16.msra.mxu0 0
    %97 = vmatprep.subr.bf16.mxu0 0
    %98 = vmatpush1.bf16.msra.mxu0 0
    %99 = vmatprep.subr.bf16.mxu0 0
    %100 = vmatpush1.bf16.msra.mxu0 %v83
    %101 = vmatprep.subr.bf16.mxu0 0
    %102 = vmatpush2.bf16.msra.mxu0 0
    %103 = vmatprep.subr.bf16.mxu0 0
    %104 = vmatpush2.bf16.msra.mxu0 0
    %105 = vmatprep.subr.bf16.mxu0 0
    %106 = vmatpush2.bf16.msra.mxu0 0
    %107 = vmatprep.subr.bf16.mxu0 0
    %108 = vmatpush2.bf16.msra.mxu0 0
    %109 = vmatprep.subr.bf16.mxu0 0
    %110 = vmatpush2.bf16.msra.mxu0 0
    %111 = vmatprep.subr.bf16.mxu0 0
    %112 = vmatpush2.bf16.msra.mxu0 0
    %113 = vmatprep.subr.bf16.mxu0 0
    %114 = vmatpush2.bf16.msra.mxu0 0
    %115 = vmatprep.subr.bf16.mxu0 0
    %116 = vmatpush2.bf16.msra.mxu0 0
    %117 = vmatprep.mubr.bf16.mxu0 0
    %118 = vmatmul.mubr.bf16.gmra.mxu0 %v79
    %v119 = vpop.f32.mrf.mxu0
    %v120 = vadd.f32 0.0, %v119
    %v121 = vpop.f32.mrf.mxu0
    %v122 = vpop.f32.mrf.mxu0
    %v123 = vpop.f32.mrf.mxu0
    %124 = vdwg.mxu0
    %v127 = vunpack.c.l.b16 %v72
    %v128 = vunpack.c.l.b16 %v73
    %v129 = vpack.c.b16 %v128, %v127
    %vm130 = vcmask 80896
    %v132 = vsel %vm130, %v71, 0
    %vm134 = vcmask 1044480
    %v136 = vsel %vm134, %v129, 0
    %138 = vmatprep.subr.bf16.mxu0 0
    %139 = vmatpush1.bf16.msra.mxu0 0
    %140 = vmatprep.subr.bf16.mxu0 0
    %141 = vmatpush1.bf16.msra.mxu0 0
    %142 = vmatprep.subr.bf16.mxu0 0
    %143 = vmatpush1.bf16.msra.mxu0 0
    %144 = vmatprep.subr.bf16.mxu0 0
    %145 = vmatpush1.bf16.msra.mxu0 0
    %146 = vmatprep.subr.bf16.mxu0 0
    %147 = vmatpush1.bf16.msra.mxu0 0
    %148 = vmatprep.subr.bf16.mxu0 0
    %149 = vmatpush1.bf16.msra.mxu0 0
    %150 = vmatprep.subr.bf16.mxu0 0
    %151 = vmatpush1.bf16.msra.mxu0 0
    %152 = vmatprep.subr.bf16.mxu0 0
    %153 = vmatpush1.bf16.msra.mxu0 %v136
    %154 = vmatprep.subr.bf16.mxu0 0
    %155 = vmatpush2.bf16.msra.mxu0 0
    %156 = vmatprep.subr.bf16.mxu0 0
    %157 = vmatpush2.bf16.msra.mxu0 0
    %158 = vmatprep.subr.bf16.mxu0 0
    %159 = vmatpush2.bf16.msra.mxu0 0
    %160 = vmatprep.subr.bf16.mxu0 0
    %161 = vmatpush2.bf16.msra.mxu0 0
    %162 = vmatprep.subr.bf16.mxu0 0
    %163 = vmatpush2.bf16.msra.mxu0 0
    %164 = vmatprep.subr.bf16.mxu0 0
    %165 = vmatpush2.bf16.msra.mxu0 0
    %166 = vmatprep.subr.bf16.mxu0 0
    %167 = vmatpush2.bf16.msra.mxu0 0
    %168 = vmatprep.subr.bf16.mxu0 0
    %169 = vmatpush2.bf16.msra.mxu0 0
    %170 = vmatprep.mubr.bf16.mxu0 0
    %171 = vmatmul.mubr.bf16.gmra.mxu0 %v132
    %v172 = vpop.f32.mrf.mxu0
    %v173 = vadd.f32 %v120, %v172
    %v174 = vpop.f32.mrf.mxu0
    %v175 = vpop.f32.mrf.mxu0
    %v176 = vpop.f32.mrf.mxu0
    %177 = vdwg.mxu0
    %v178 = vld [vmem:[#allocation7] sm:$0x1]
    %v180 = vlaneseq
    %v181 = vshrl.u32 %v180, 7
    %v182 = vsub.s32 0, %v181
    %v183 = vrot.slane %v178, %v182
    %v185 = vadd.f32 %v173, %v183
    %v186 = vmax.f32 %v185, 0.0
    %v187 = vpack.c.bf16 %v186, %v186
    %v188 = vld [vmem:[%s5] sm:$0xf]
    %v189 = vld [vmem:[%s5 + $0x4] sm:$0xf]
    %v190 = vld [vmem:[%s5 + $0x8] sm:$0xf]
    %v191 = vld [vmem:[%s5 + $0xc] sm:$0xf]
    %v192 = vld [vmem:[%s5 + $0x10] sm:$0xf]
    %v193 = vld [vmem:[%s5 + $0x14] sm:$0xf]
    %v194 = vld [vmem:[%s5 + $0x18] sm:$0xf]
    %v195 = vld [vmem:[%s5 + $0x1c] sm:$0xf]
    %v196 = vld [vmem:[%s5 + $0x20] sm:$0xf]
    %v197 = vld [vmem:[%s5 + $0x24] sm:$0xf]
    %v198 = vld [vmem:[%s5 + $0x28] sm:$0xf]
    %v199 = vld [vmem:[%s5 + $0x2c] sm:$0xf]
    %v200 = vld [vmem:[%s5 + $0x30] sm:$0xf]
    %v201 = vld [vmem:[%s5 + $0x34] sm:$0xf]
    %v202 = vld [vmem:[%s5 + $0x38] sm:$0xf]
    %v203 = vld [vmem:[%s5 + $0x3c] sm:$0xf]
    %v204 = vld [vmem:[%s6] sm:$0x1]
    %v206 = vlaneseq
    %v207 = vshrl.u32 %v206, 7
    %v208 = vsub.s32 0, %v207
    %v209 = vrot.slane %v204, %v208
    %v227 = vunpack.c.l.b16 %v188
    %v228 = vunpack.c.l.b16 %v189
    %v229 = vunpack.c.l.b16 %v190
    %v230 = vunpack.c.l.b16 %v191
    %v231 = vunpack.c.l.b16 %v192
    %v232 = vunpack.c.l.b16 %v193
    %v233 = vunpack.c.l.b16 %v194
    %v234 = vunpack.c.l.b16 %v195
    %v235 = vunpack.c.l.b16 %v196
    %v236 = vunpack.c.l.b16 %v197
    %v237 = vunpack.c.l.b16 %v198
    %v238 = vunpack.c.l.b16 %v199
    %v239 = vunpack.c.l.b16 %v200
    %v240 = vunpack.c.l.b16 %v201
    %v241 = vunpack.c.l.b16 %v202
    %v242 = vunpack.c.l.b16 %v203
    %v243 = vpack.c.b16 %v228, %v227
    %v244 = vpack.c.b16 %v230, %v229
    %v245 = vpack.c.b16 %v232, %v231
    %v246 = vpack.c.b16 %v234, %v233
    %v247 = vpack.c.b16 %v236, %v235
    %v248 = vpack.c.b16 %v238, %v237
    %v249 = vpack.c.b16 %v240, %v239
    %v250 = vpack.c.b16 %v242, %v241
    %259 = vmatprep.subr.bf16.mxu0 0
    %260 = vmatpush1.bf16.msra.mxu0 %v250
    %261 = vmatprep.subr.bf16.mxu0 0
    %262 = vmatpush1.bf16.msra.mxu0 %v249
    %263 = vmatprep.subr.bf16.mxu0 0
    %264 = vmatpush1.bf16.msra.mxu0 %v248
    %265 = vmatprep.subr.bf16.mxu0 0
    %266 = vmatpush1.bf16.msra.mxu0 %v247
    %267 = vmatprep.subr.bf16.mxu0 0
    %268 = vmatpush1.bf16.msra.mxu0 %v246
    %269 = vmatprep.subr.bf16.mxu0 0
    %270 = vmatpush1.bf16.msra.mxu0 %v245
    %271 = vmatprep.subr.bf16.mxu0 0
    %272 = vmatpush1.bf16.msra.mxu0 %v244
    %273 = vmatprep.subr.bf16.mxu0 0
    %274 = vmatpush1.bf16.msra.mxu0 %v243
    %275 = vmatprep.subr.bf16.mxu0 0
    %276 = vmatpush2.bf16.msra.mxu0 0
    %277 = vmatprep.subr.bf16.mxu0 0
    %278 = vmatpush2.bf16.msra.mxu0 0
    %279 = vmatprep.subr.bf16.mxu0 0
    %280 = vmatpush2.bf16.msra.mxu0 0
    %281 = vmatprep.subr.bf16.mxu0 0
    %282 = vmatpush2.bf16.msra.mxu0 0
    %283 = vmatprep.subr.bf16.mxu0 0
    %284 = vmatpush2.bf16.msra.mxu0 0
    %285 = vmatprep.subr.bf16.mxu0 0
    %286 = vmatpush2.bf16.msra.mxu0 0
    %287 = vmatprep.subr.bf16.mxu0 0
    %288 = vmatpush2.bf16.msra.mxu0 0
    %289 = vmatprep.subr.bf16.mxu0 0
    %290 = vmatpush2.bf16.msra.mxu0 0
    %291 = vmatprep.mubr.bf16.mxu0 0
    %292 = vmatmul.mubr.bf16.gmra.mxu0 %v187
    %v293 = vpop.f32.mrf.mxu0
    %v294 = vadd.f32 %v209, %v293
    %v295 = vpop.f32.mrf.mxu0
    %v296 = vpop.f32.mrf.mxu0
    %v297 = vpop.f32.mrf.mxu0
    %298 = vdwg.mxu0
    %v299 = vmax.f32 %v294, 0.0
    %v300 = vpack.c.bf16 %v299, %v299
    %v301 = vld [vmem:[%s7] sm:$0xf]
    %v302 = vld [vmem:[%s7 + $0x4] sm:$0xf]
    %v303 = vld [vmem:[%s7 + $0x8] sm:$0xf]
    %v304 = vld [vmem:[%s7 + $0xc] sm:$0xf]
    %v305 = vld [vmem:[%s7 + $0x10] sm:$0xf]
    %v306 = vld [vmem:[%s7 + $0x14] sm:$0xf]
    %v307 = vld [vmem:[%s7 + $0x18] sm:$0xf]
    %v308 = vld [vmem:[%s7 + $0x1c] sm:$0xf]
    %v309 = vld [vmem:[%s7 + $0x20] sm:$0xf]
    %v310 = vld [vmem:[%s7 + $0x24] sm:$0xf]
    %v311 = vld [vmem:[%s7 + $0x28] sm:$0xf]
    %v312 = vld [vmem:[%s7 + $0x2c] sm:$0xf]
    %v313 = vld [vmem:[%s7 + $0x30] sm:$0xf]
    %v314 = vld [vmem:[%s7 + $0x34] sm:$0xf]
    %v315 = vld [vmem:[%s7 + $0x38] sm:$0xf]
    %v316 = vld [vmem:[%s7 + $0x3c] sm:$0xf]
    %v317 = vld [vmem:[#allocation2] sm:$0x1]
    %v319 = vlaneseq
    %v320 = vshrl.u32 %v319, 7
    %v321 = vsub.s32 0, %v320
    %v322 = vrot.slane %v317, %v321
    %v340 = vunpack.c.l.b16 %v301
    %v341 = vunpack.c.l.b16 %v302
    %v342 = vunpack.c.l.b16 %v303
    %v343 = vunpack.c.l.b16 %v304
    %v344 = vunpack.c.l.b16 %v305
    %v345 = vunpack.c.l.b16 %v306
    %v346 = vunpack.c.l.b16 %v307
    %v347 = vunpack.c.l.b16 %v308
    %v348 = vunpack.c.l.b16 %v309
    %v349 = vunpack.c.l.b16 %v310
    %v350 = vunpack.c.l.b16 %v311
    %v351 = vunpack.c.l.b16 %v312
    %v352 = vunpack.c.l.b16 %v313
    %v353 = vunpack.c.l.b16 %v314
    %v354 = vunpack.c.l.b16 %v315
    %v355 = vunpack.c.l.b16 %v316
    %v356 = vpack.c.b16 %v341, %v340
    %v357 = vpack.c.b16 %v343, %v342
    %v358 = vpack.c.b16 %v345, %v344
    %v359 = vpack.c.b16 %v347, %v346
    %v360 = vpack.c.b16 %v349, %v348
    %v361 = vpack.c.b16 %v351, %v350
    %v362 = vpack.c.b16 %v353, %v352
    %v363 = vpack.c.b16 %v355, %v354
    %372 = vmatprep.subr.bf16.mxu0 0
    %373 = vmatpush1.bf16.msra.mxu0 %v363
    %374 = vmatprep.subr.bf16.mxu0 0
    %375 = vmatpush1.bf16.msra.mxu0 %v362
    %376 = vmatprep.subr.bf16.mxu0 0
    %377 = vmatpush1.bf16.msra.mxu0 %v361
    %378 = vmatprep.subr.bf16.mxu0 0
    %379 = vmatpush1.bf16.msra.mxu0 %v360
    %380 = vmatprep.subr.bf16.mxu0 0
    %381 = vmatpush1.bf16.msra.mxu0 %v359
    %382 = vmatprep.subr.bf16.mxu0 0
    %383 = vmatpush1.bf16.msra.mxu0 %v358
    %384 = vmatprep.subr.bf16.mxu0 0
    %385 = vmatpush1.bf16.msra.mxu0 %v357
    %386 = vmatprep.subr.bf16.mxu0 0
    %387 = vmatpush1.bf16.msra.mxu0 %v356
    %388 = vmatprep.subr.bf16.mxu0 0
    %389 = vmatpush2.bf16.msra.mxu0 0
    %390 = vmatprep.subr.bf16.mxu0 0
    %391 = vmatpush2.bf16.msra.mxu0 0
    %392 = vmatprep.subr.bf16.mxu0 0
    %393 = vmatpush2.bf16.msra.mxu0 0
    %394 = vmatprep.subr.bf16.mxu0 0
    %395 = vmatpush2.bf16.msra.mxu0 0
    %396 = vmatprep.subr.bf16.mxu0 0
    %397 = vmatpush2.bf16.msra.mxu0 0
    %398 = vmatprep.subr.bf16.mxu0 0
    %399 = vmatpush2.bf16.msra.mxu0 0
    %400 = vmatprep.subr.bf16.mxu0 0
    %401 = vmatpush2.bf16.msra.mxu0 0
    %402 = vmatprep.subr.bf16.mxu0 0
    %403 = vmatpush2.bf16.msra.mxu0 0
    %404 = vmatprep.mubr.bf16.mxu0 0
    %405 = vmatmul.mubr.bf16.gmra.mxu0 %v300
    %v406 = vpop.f32.mrf.mxu0
    %v407 = vadd.f32 %v322, %v406
    %v408 = vpop.f32.mrf.mxu0
    %v409 = vpop.f32.mrf.mxu0
    %v410 = vpop.f32.mrf.mxu0
    %411 = vdwg.mxu0
    %vm412 = vcmask 3072
    %413 = vst.msk [vmem:[%s9] sm:$0xf] %vm412, %v407
    // Predicated region
    $region50: #{tpu_custom_call.1} parent=1 // pred_check
      _
    $region51: #{tpu_custom_call.1} parent=1 // pred_check_branch
      %415 = sbr.rel (0) target = $region53
    $region52: #{tpu_custom_call.1} parent=1 // pred_region
      _
    $region53: #{tpu_custom_call.1} parent=1 // pred_fallthru
      _
    // Predicated region
    $region54: #{tpu_custom_call.1} parent=1 // pred_check
      _
    $region55: #{tpu_custom_call.1} parent=1 // pred_check_branch
      %417 = sbr.rel (0) target = $region57
    $region56: #{tpu_custom_call.1} parent=1 // pred_region
      _
    $region57: #{tpu_custom_call.1} parent=1 // pred_fallthru
      _
    %418 = vsyncpa [#allocation4], 1
    %419 = vsyncpa [#allocation6], 1

</llo_original>
